<compile_context>
chip_gen: v7x
topology: tpu7x:2x2x1
jax: 0.10.0
libtpu: 0.0.40
codegen_flags: <defaults>
</compile_context>

<pallas_src>
import jax
import jax.numpy as jnp
from jax import lax
from jax.experimental import pallas as pl
from jax.experimental.pallas import tpu as pltpu


def siamese_kernel(ids_ref, table_ref, bias_ref, out_ref):
    """ids_ref:   SMEM (2B*L,) int32 -- rows [0:B*L) = sentence1, [B*L:2B*L) = sentence2
       table_ref: VMEM (V, H)   f32  -- fused embedding table (emb @ w), row 0 == 0
       bias_ref:  VMEM (1, H)   f32
       out_ref:   VMEM (1, B)   f32  -- lane-dense cosine "distances"
    """
    H = table_ref.shape[1]
    B = out_ref.shape[1]
    n_rows = 2 * B
    L = ids_ref.shape[0] // n_rows

    # --- encoder: gather + max-pool over the sequence (no MXU work needed) ---
    pooled = []
    for n in range(n_rows):                               # static, tiny (2B rows)
        # gather all L rows first (independent dynamic (1, H) reads) ...
        rows = [table_ref[pl.ds(ids_ref[n * L + l], 1), :] for l in range(L)]
        # ... then reduce with a balanced max tree (depth ceil(log2 L))
        while len(rows) > 1:
            nxt = [jnp.maximum(rows[i], rows[i + 1])
                   for i in range(0, len(rows) - 1, 2)]
            if len(rows) % 2:
                nxt.append(rows[-1])
            rows = nxt
        pooled.append(rows[0])                            # (1, H)
    # bias is token-invariant, so it commutes with the max-pool
    enc = jnp.concatenate(pooled, axis=0) + bias_ref[...]          # (2B, H)

    # --- cosine distance on un-normalized encodings (rsqrt instead of divides) ---
    v1 = enc[:B, :]
    v2 = enc[B:, :]
    d12 = jnp.sum(v1 * v2, axis=-1, keepdims=True)                 # (B, 1)
    n1 = jnp.sum(v1 * v1, axis=-1, keepdims=True)                  # (B, 1)
    n2 = jnp.sum(v2 * v2, axis=-1, keepdims=True)                  # (B, 1)
    eps2 = 1e-24                                                   # (F.normalize eps=1e-12)**2
    inv = lax.rsqrt(jnp.maximum(n1, eps2)) * lax.rsqrt(jnp.maximum(n2, eps2))
    dist = 0.5 * (1.0 + d12 * inv)                                 # (B, 1)
    out_ref[...] = jnp.transpose(dist)                             # (1, B) lane-dense store


@jax.jit
def siamese_forward(sentence1, sentence2, emb, w, b):
    """Equivalent of SiameseNetwork.forward(sentence1, sentence2) (no target)."""
    B, _ = sentence1.shape
    _, H = emb.shape

    # Fold the Linear into the embedding table (parameter-only precompute).
    table = jnp.dot(emb, w, preferred_element_type=jnp.float32)              # (V, H)
    # Flat 1-D id vector -> minimal SMEM footprint (no [8,128]-word 2-D padding).
    ids = jnp.concatenate([sentence1, sentence2], axis=0).reshape(-1).astype(jnp.int32)
    bias = jnp.reshape(b, (1, H)).astype(jnp.float32)

    out = pl.pallas_call(
        siamese_kernel,
        out_shape=jax.ShapeDtypeStruct((1, B), jnp.float32),
        in_specs=[
            pl.BlockSpec(memory_space=pltpu.MemorySpace.SMEM),   # token ids (scalars)
            pl.BlockSpec(memory_space=pltpu.MemorySpace.VMEM),   # fused emb@w table
            pl.BlockSpec(memory_space=pltpu.MemorySpace.VMEM),   # bias
        ],
        out_specs=pl.BlockSpec(memory_space=pltpu.MemorySpace.VMEM),
    )(ids, table, bias)
    return out[0]                                                # (B,)

# TODO(synk): CosineEmbeddingLoss / cosine_triplet_loss (target path) and the
# encoder-only path (sentence2 is None) are not implemented; only the
# inference path (encoder + cosine distance) is covered.  nn.Dropout is
# defined but never applied in the torch forward, so it is omitted.


if __name__ == "__main__":
    config = {"hidden_size": 32, "vocab_size": 30, "max_length": 8}
    B = 2
    L = config["max_length"]
    H = config["hidden_size"]
    V = config["vocab_size"] + 1

    key = jax.random.PRNGKey(0)
    k_emb, k_w, k_b, k_s1, k_s2 = jax.random.split(key, 5)

    # deterministic synthetic parameters
    emb = jax.random.normal(k_emb, (V, H), dtype=jnp.float32) * 0.1
    emb = emb.at[0].set(0.0)                        # padding_idx=0
    w = jax.random.normal(k_w, (H, H), dtype=jnp.float32) * 0.1
    b = jax.random.normal(k_b, (1, H), dtype=jnp.float32) * 0.1

    # deterministic synthetic token ids
    sentence1 = jax.random.randint(k_s1, (B, L), 0, V, dtype=jnp.int32)
    sentence2 = jax.random.randint(k_s2, (B, L), 0, V, dtype=jnp.int32)

    out = siamese_forward(sentence1, sentence2, emb, w, b)
    jax.block_until_ready(out)

    # sanity check against a plain-JAX reference that follows the original
    # (un-fused) torch computation order
    def ref_encode(ids):
        x = emb[ids]                                # (B, L, H)
        x = x @ w + b                               # (B, L, H)
        return jnp.max(x, axis=1)                   # (B, H)

    def ref_norm(v):
        n = jnp.sqrt(jnp.sum(v * v, axis=-1, keepdims=True))
        return v / jnp.maximum(n, 1e-12)

    v1, v2 = ref_norm(ref_encode(sentence1)), ref_norm(ref_encode(sentence2))
    ref = 0.5 * (1.0 + jnp.sum(v1 * v2, axis=-1))
    assert jnp.allclose(out, ref, atol=1e-5), (out, ref)

    print("KERNEL_OK")
</pallas_src>

<mosaic_0001>
module attributes {stable_mosaic.version = 11 : i64} {
  func.func @siamese_kernel(%arg0: memref<32xi32, #tpu.memory_space<smem>>, %arg1: memref<31x32xf32, #tpu.memory_space<vmem>>, %arg2: memref<1x32xf32, #tpu.memory_space<vmem>>, %arg3: memref<1x2xf32, #tpu.memory_space<vmem>>) attributes {dimension_semantics = [], scalar_prefetch = 0 : i64, scratch_operands = 0 : i64, tpu.core_type = #tpu.core_type<tc>} {
    %c0 = arith.constant 0 : index
    %0 = memref.load %arg0[%c0] : memref<32xi32, #tpu.memory_space<smem>>
    %1 = arith.index_cast %0 : i32 to index
    %c0_0 = arith.constant 0 : index
    %2 = vector.load %arg1[%1, %c0_0] : memref<31x32xf32, #tpu.memory_space<vmem>>, vector<1x32xf32>
    %c1 = arith.constant 1 : index
    %3 = memref.load %arg0[%c1] : memref<32xi32, #tpu.memory_space<smem>>
    %4 = arith.index_cast %3 : i32 to index
    %c0_1 = arith.constant 0 : index
    %5 = vector.load %arg1[%4, %c0_1] : memref<31x32xf32, #tpu.memory_space<vmem>>, vector<1x32xf32>
    %c2 = arith.constant 2 : index
    %6 = memref.load %arg0[%c2] : memref<32xi32, #tpu.memory_space<smem>>
    %7 = arith.index_cast %6 : i32 to index
    %c0_2 = arith.constant 0 : index
    %8 = vector.load %arg1[%7, %c0_2] : memref<31x32xf32, #tpu.memory_space<vmem>>, vector<1x32xf32>
    %c3 = arith.constant 3 : index
    %9 = memref.load %arg0[%c3] : memref<32xi32, #tpu.memory_space<smem>>
    %10 = arith.index_cast %9 : i32 to index
    %c0_3 = arith.constant 0 : index
    %11 = vector.load %arg1[%10, %c0_3] : memref<31x32xf32, #tpu.memory_space<vmem>>, vector<1x32xf32>
    %c4 = arith.constant 4 : index
    %12 = memref.load %arg0[%c4] : memref<32xi32, #tpu.memory_space<smem>>
    %13 = arith.index_cast %12 : i32 to index
    %c0_4 = arith.constant 0 : index
    %14 = vector.load %arg1[%13, %c0_4] : memref<31x32xf32, #tpu.memory_space<vmem>>, vector<1x32xf32>
    %c5 = arith.constant 5 : index
    %15 = memref.load %arg0[%c5] : memref<32xi32, #tpu.memory_space<smem>>
    %16 = arith.index_cast %15 : i32 to index
    %c0_5 = arith.constant 0 : index
    %17 = vector.load %arg1[%16, %c0_5] : memref<31x32xf32, #tpu.memory_space<vmem>>, vector<1x32xf32>
    %c6 = arith.constant 6 : index
    %18 = memref.load %arg0[%c6] : memref<32xi32, #tpu.memory_space<smem>>
    %19 = arith.index_cast %18 : i32 to index
    %c0_6 = arith.constant 0 : index
    %20 = vector.load %arg1[%19, %c0_6] : memref<31x32xf32, #tpu.memory_space<vmem>>, vector<1x32xf32>
    %c7 = arith.constant 7 : index
    %21 = memref.load %arg0[%c7] : memref<32xi32, #tpu.memory_space<smem>>
    %22 = arith.index_cast %21 : i32 to index
    %c0_7 = arith.constant 0 : index
    %23 = vector.load %arg1[%22, %c0_7] : memref<31x32xf32, #tpu.memory_space<vmem>>, vector<1x32xf32>
    %24 = arith.maximumf %2, %5 : vector<1x32xf32>
    %25 = arith.maximumf %8, %11 : vector<1x32xf32>
    %26 = arith.maximumf %14, %17 : vector<1x32xf32>
    %27 = arith.maximumf %20, %23 : vector<1x32xf32>
    %28 = arith.maximumf %24, %25 : vector<1x32xf32>
    %29 = arith.maximumf %26, %27 : vector<1x32xf32>
    %30 = arith.maximumf %28, %29 : vector<1x32xf32>
    %c8 = arith.constant 8 : index
    %31 = memref.load %arg0[%c8] : memref<32xi32, #tpu.memory_space<smem>>
    %32 = arith.index_cast %31 : i32 to index
    %c0_8 = arith.constant 0 : index
    %33 = vector.load %arg1[%32, %c0_8] : memref<31x32xf32, #tpu.memory_space<vmem>>, vector<1x32xf32>
    %c9 = arith.constant 9 : index
    %34 = memref.load %arg0[%c9] : memref<32xi32, #tpu.memory_space<smem>>
    %35 = arith.index_cast %34 : i32 to index
    %c0_9 = arith.constant 0 : index
    %36 = vector.load %arg1[%35, %c0_9] : memref<31x32xf32, #tpu.memory_space<vmem>>, vector<1x32xf32>
    %c10 = arith.constant 10 : index
    %37 = memref.load %arg0[%c10] : memref<32xi32, #tpu.memory_space<smem>>
    %38 = arith.index_cast %37 : i32 to index
    %c0_10 = arith.constant 0 : index
    %39 = vector.load %arg1[%38, %c0_10] : memref<31x32xf32, #tpu.memory_space<vmem>>, vector<1x32xf32>
    %c11 = arith.constant 11 : index
    %40 = memref.load %arg0[%c11] : memref<32xi32, #tpu.memory_space<smem>>
    %41 = arith.index_cast %40 : i32 to index
    %c0_11 = arith.constant 0 : index
    %42 = vector.load %arg1[%41, %c0_11] : memref<31x32xf32, #tpu.memory_space<vmem>>, vector<1x32xf32>
    %c12 = arith.constant 12 : index
    %43 = memref.load %arg0[%c12] : memref<32xi32, #tpu.memory_space<smem>>
    %44 = arith.index_cast %43 : i32 to index
    %c0_12 = arith.constant 0 : index
    %45 = vector.load %arg1[%44, %c0_12] : memref<31x32xf32, #tpu.memory_space<vmem>>, vector<1x32xf32>
    %c13 = arith.constant 13 : index
    %46 = memref.load %arg0[%c13] : memref<32xi32, #tpu.memory_space<smem>>
    %47 = arith.index_cast %46 : i32 to index
    %c0_13 = arith.constant 0 : index
    %48 = vector.load %arg1[%47, %c0_13] : memref<31x32xf32, #tpu.memory_space<vmem>>, vector<1x32xf32>
    %c14 = arith.constant 14 : index
    %49 = memref.load %arg0[%c14] : memref<32xi32, #tpu.memory_space<smem>>
    %50 = arith.index_cast %49 : i32 to index
    %c0_14 = arith.constant 0 : index
    %51 = vector.load %arg1[%50, %c0_14] : memref<31x32xf32, #tpu.memory_space<vmem>>, vector<1x32xf32>
    %c15 = arith.constant 15 : index
    %52 = memref.load %arg0[%c15] : memref<32xi32, #tpu.memory_space<smem>>
    %53 = arith.index_cast %52 : i32 to index
    %c0_15 = arith.constant 0 : index
    %54 = vector.load %arg1[%53, %c0_15] : memref<31x32xf32, #tpu.memory_space<vmem>>, vector<1x32xf32>
    %55 = arith.maximumf %33, %36 : vector<1x32xf32>
    %56 = arith.maximumf %39, %42 : vector<1x32xf32>
    %57 = arith.maximumf %45, %48 : vector<1x32xf32>
    %58 = arith.maximumf %51, %54 : vector<1x32xf32>
    %59 = arith.maximumf %55, %56 : vector<1x32xf32>
    %60 = arith.maximumf %57, %58 : vector<1x32xf32>
    %61 = arith.maximumf %59, %60 : vector<1x32xf32>
    %c16 = arith.constant 16 : index
    %62 = memref.load %arg0[%c16] : memref<32xi32, #tpu.memory_space<smem>>
    %63 = arith.index_cast %62 : i32 to index
    %c0_16 = arith.constant 0 : index
    %64 = vector.load %arg1[%63, %c0_16] : memref<31x32xf32, #tpu.memory_space<vmem>>, vector<1x32xf32>
    %c17 = arith.constant 17 : index
    %65 = memref.load %arg0[%c17] : memref<32xi32, #tpu.memory_space<smem>>
    %66 = arith.index_cast %65 : i32 to index
    %c0_17 = arith.constant 0 : index
    %67 = vector.load %arg1[%66, %c0_17] : memref<31x32xf32, #tpu.memory_space<vmem>>, vector<1x32xf32>
    %c18 = arith.constant 18 : index
    %68 = memref.load %arg0[%c18] : memref<32xi32, #tpu.memory_space<smem>>
    %69 = arith.index_cast %68 : i32 to index
    %c0_18 = arith.constant 0 : index
    %70 = vector.load %arg1[%69, %c0_18] : memref<31x32xf32, #tpu.memory_space<vmem>>, vector<1x32xf32>
    %c19 = arith.constant 19 : index
    %71 = memref.load %arg0[%c19] : memref<32xi32, #tpu.memory_space<smem>>
    %72 = arith.index_cast %71 : i32 to index
    %c0_19 = arith.constant 0 : index
    %73 = vector.load %arg1[%72, %c0_19] : memref<31x32xf32, #tpu.memory_space<vmem>>, vector<1x32xf32>
    %c20 = arith.constant 20 : index
    %74 = memref.load %arg0[%c20] : memref<32xi32, #tpu.memory_space<smem>>
    %75 = arith.index_cast %74 : i32 to index
    %c0_20 = arith.constant 0 : index
    %76 = vector.load %arg1[%75, %c0_20] : memref<31x32xf32, #tpu.memory_space<vmem>>, vector<1x32xf32>
    %c21 = arith.constant 21 : index
    %77 = memref.load %arg0[%c21] : memref<32xi32, #tpu.memory_space<smem>>
    %78 = arith.index_cast %77 : i32 to index
    %c0_21 = arith.constant 0 : index
    %79 = vector.load %arg1[%78, %c0_21] : memref<31x32xf32, #tpu.memory_space<vmem>>, vector<1x32xf32>
    %c22 = arith.constant 22 : index
    %80 = memref.load %arg0[%c22] : memref<32xi32, #tpu.memory_space<smem>>
    %81 = arith.index_cast %80 : i32 to index
    %c0_22 = arith.constant 0 : index
    %82 = vector.load %arg1[%81, %c0_22] : memref<31x32xf32, #tpu.memory_space<vmem>>, vector<1x32xf32>
    %c23 = arith.constant 23 : index
    %83 = memref.load %arg0[%c23] : memref<32xi32, #tpu.memory_space<smem>>
    %84 = arith.index_cast %83 : i32 to index
    %c0_23 = arith.constant 0 : index
    %85 = vector.load %arg1[%84, %c0_23] : memref<31x32xf32, #tpu.memory_space<vmem>>, vector<1x32xf32>
    %86 = arith.maximumf %64, %67 : vector<1x32xf32>
    %87 = arith.maximumf %70, %73 : vector<1x32xf32>
    %88 = arith.maximumf %76, %79 : vector<1x32xf32>
    %89 = arith.maximumf %82, %85 : vector<1x32xf32>
    %90 = arith.maximumf %86, %87 : vector<1x32xf32>
    %91 = arith.maximumf %88, %89 : vector<1x32xf32>
    %92 = arith.maximumf %90, %91 : vector<1x32xf32>
    %c24 = arith.constant 24 : index
    %93 = memref.load %arg0[%c24] : memref<32xi32, #tpu.memory_space<smem>>
    %94 = arith.index_cast %93 : i32 to index
    %c0_24 = arith.constant 0 : index
    %95 = vector.load %arg1[%94, %c0_24] : memref<31x32xf32, #tpu.memory_space<vmem>>, vector<1x32xf32>
    %c25 = arith.constant 25 : index
    %96 = memref.load %arg0[%c25] : memref<32xi32, #tpu.memory_space<smem>>
    %97 = arith.index_cast %96 : i32 to index
    %c0_25 = arith.constant 0 : index
    %98 = vector.load %arg1[%97, %c0_25] : memref<31x32xf32, #tpu.memory_space<vmem>>, vector<1x32xf32>
    %c26 = arith.constant 26 : index
    %99 = memref.load %arg0[%c26] : memref<32xi32, #tpu.memory_space<smem>>
    %100 = arith.index_cast %99 : i32 to index
    %c0_26 = arith.constant 0 : index
    %101 = vector.load %arg1[%100, %c0_26] : memref<31x32xf32, #tpu.memory_space<vmem>>, vector<1x32xf32>
    %c27 = arith.constant 27 : index
    %102 = memref.load %arg0[%c27] : memref<32xi32, #tpu.memory_space<smem>>
    %103 = arith.index_cast %102 : i32 to index
    %c0_27 = arith.constant 0 : index
    %104 = vector.load %arg1[%103, %c0_27] : memref<31x32xf32, #tpu.memory_space<vmem>>, vector<1x32xf32>
    %c28 = arith.constant 28 : index
    %105 = memref.load %arg0[%c28] : memref<32xi32, #tpu.memory_space<smem>>
    %106 = arith.index_cast %105 : i32 to index
    %c0_28 = arith.constant 0 : index
    %107 = vector.load %arg1[%106, %c0_28] : memref<31x32xf32, #tpu.memory_space<vmem>>, vector<1x32xf32>
    %c29 = arith.constant 29 : index
    %108 = memref.load %arg0[%c29] : memref<32xi32, #tpu.memory_space<smem>>
    %109 = arith.index_cast %108 : i32 to index
    %c0_29 = arith.constant 0 : index
    %110 = vector.load %arg1[%109, %c0_29] : memref<31x32xf32, #tpu.memory_space<vmem>>, vector<1x32xf32>
    %c30 = arith.constant 30 : index
    %111 = memref.load %arg0[%c30] : memref<32xi32, #tpu.memory_space<smem>>
    %112 = arith.index_cast %111 : i32 to index
    %c0_30 = arith.constant 0 : index
    %113 = vector.load %arg1[%112, %c0_30] : memref<31x32xf32, #tpu.memory_space<vmem>>, vector<1x32xf32>
    %c31 = arith.constant 31 : index
    %114 = memref.load %arg0[%c31] : memref<32xi32, #tpu.memory_space<smem>>
    %115 = arith.index_cast %114 : i32 to index
    %c0_31 = arith.constant 0 : index
    %116 = vector.load %arg1[%115, %c0_31] : memref<31x32xf32, #tpu.memory_space<vmem>>, vector<1x32xf32>
    %117 = arith.maximumf %95, %98 : vector<1x32xf32>
    %118 = arith.maximumf %101, %104 : vector<1x32xf32>
    %119 = arith.maximumf %107, %110 : vector<1x32xf32>
    %120 = arith.maximumf %113, %116 : vector<1x32xf32>
    %121 = arith.maximumf %117, %118 : vector<1x32xf32>
    %122 = arith.maximumf %119, %120 : vector<1x32xf32>
    %123 = arith.maximumf %121, %122 : vector<1x32xf32>
    %124 = tpu.concatenate %30, %61, %92, %123 in 0 : vector<1x32xf32>, vector<1x32xf32>, vector<1x32xf32>, vector<1x32xf32> -> vector<4x32xf32>
    %c0_32 = arith.constant 0 : index
    %c0_33 = arith.constant 0 : index
    %125 = vector.load %arg2[%c0_32, %c0_33] : memref<1x32xf32, #tpu.memory_space<vmem>>, vector<1x32xf32>
    %126 = vector.broadcast %125 : vector<1x32xf32> to vector<4x32xf32>
    %127 = arith.addf %124, %126 : vector<4x32xf32>
    %128 = vector.extract_strided_slice %127 {offsets = [0, 0], sizes = [2, 32], strides = [1, 1]} : vector<4x32xf32> to vector<2x32xf32>
    %129 = vector.extract_strided_slice %127 {offsets = [2, 0], sizes = [2, 32], strides = [1, 1]} : vector<4x32xf32> to vector<2x32xf32>
    %130 = arith.mulf %128, %129 : vector<2x32xf32>
    %cst = arith.constant dense<0.000000e+00> : vector<2xf32>
    %131 = vector.multi_reduction <add>, %130, %cst [1] : vector<2x32xf32> to vector<2xf32>
    %132 = vector.shape_cast %131 : vector<2xf32> to vector<2x1xf32>
    %133 = arith.mulf %128, %128 : vector<2x32xf32>
    %cst_34 = arith.constant dense<0.000000e+00> : vector<2xf32>
    %134 = vector.multi_reduction <add>, %133, %cst_34 [1] : vector<2x32xf32> to vector<2xf32>
    %135 = vector.shape_cast %134 : vector<2xf32> to vector<2x1xf32>
    %136 = arith.mulf %129, %129 : vector<2x32xf32>
    %cst_35 = arith.constant dense<0.000000e+00> : vector<2xf32>
    %137 = vector.multi_reduction <add>, %136, %cst_35 [1] : vector<2x32xf32> to vector<2xf32>
    %138 = vector.shape_cast %137 : vector<2xf32> to vector<2x1xf32>
    %cst_36 = arith.constant 1.000000e-24 : f32
    %139 = vector.broadcast %cst_36 : f32 to vector<2x1xf32>
    %140 = arith.maximumf %135, %139 : vector<2x1xf32>
    %141 = math.rsqrt %140 : vector<2x1xf32>
    %cst_37 = arith.constant 1.000000e-24 : f32
    %142 = vector.broadcast %cst_37 : f32 to vector<2x1xf32>
    %143 = arith.maximumf %138, %142 : vector<2x1xf32>
    %144 = math.rsqrt %143 : vector<2x1xf32>
    %145 = arith.mulf %141, %144 : vector<2x1xf32>
    %146 = arith.mulf %132, %145 : vector<2x1xf32>
    %cst_38 = arith.constant 1.000000e+00 : f32
    %147 = vector.broadcast %cst_38 : f32 to vector<2x1xf32>
    %148 = arith.addf %147, %146 : vector<2x1xf32>
    %cst_39 = arith.constant 5.000000e-01 : f32
    %149 = vector.broadcast %cst_39 : f32 to vector<2x1xf32>
    %150 = arith.mulf %149, %148 : vector<2x1xf32>
    %151 = tpu.transpose %150, [1, 0] : vector<2x1xf32> -> vector<1x2xf32>
    %c0_40 = arith.constant 0 : index
    %c0_41 = arith.constant 0 : index
    %152 = vector.load %arg3[%c0_40, %c0_41] : memref<1x2xf32, #tpu.memory_space<vmem>>, vector<1x2xf32>
    tpu.vector_store %arg3[%c0_40, %c0_41], %151 {strides = array<i32>} : memref<1x2xf32, #tpu.memory_space<vmem>>, vector<1x2xf32>,
    return
  }
}

</mosaic_0001>

<llo_original>
// kernel: siamese_forward.1
$region0: #{siamese_forward.1}
  #allocation0 [shape = 'u32[]', space=smem, size = 0x4, offset = 0x4, fixed_abs, tag = 'smem constant byte address 0x4 - core index']
  #allocation1 [shape = 'u32[144,128]{1,0:T(1,128)}', space=vmem, size = 0x12000, scoped, tag = 'internal scratch']
  %s0 = inlined_call_operand.vmem [shape: s32[32], index: 0, kind: input, shape index: {}]
  %s1 = inlined_call_operand.vmem [shape: f32[31,32], index: 1, kind: input, shape index: {}]
  %s2 = inlined_call_operand.vmem [shape: f32[1,32], index: 2, kind: input, shape index: {}]
  %s3 = inlined_call_operand.hbm [shape: f32[1,2], index: 3, kind: output, shape index: {}]
  %s4 = sld [smem:[#allocation0]]
  $region26: #{siamese_forward.1} parent=0
    _
  %s6 = ssub.s32 1, %s4
  %s7 = scalar_select 0, %s6, %s4
  $region1: #{siamese_forward.1} parent=0
    #allocation2 [shape = 'u8[512]{0}', space=smem, size = 0x200, scoped, tag = 'input window, operand 0, single buffered']
    #allocation3 [shape = 's32[1]{0}', space=sflag, size = 0x4, scoped, tag = 'scoped memory for siamese_forward.1']
    #allocation4 [shape = 's32[1]{0}', space=sflag, size = 0x4, scoped, tag = 'scoped memory for siamese_forward.1']
    #allocation5 [shape = 'u8[512]{0}', space=vmem, size = 0x400, scoped, tag = 'output window, operand 0, single buffered']
    %8 = vsyncpa [#allocation4], 0
    %9 = vsyncpa [#allocation3], 0
    // Predicated region
    $region2: #{siamese_forward.1} parent=1 // pred_check
      _
    $region3: #{siamese_forward.1} parent=1 // pred_check_branch
      %11 = sbr.rel (0) target = $region5
    $region4: #{siamese_forward.1} parent=1 // pred_region
      %s13 = ssub.s32 16, 16
      %14 = vsyncadd [#allocation4], %s13
      %s16 = sshll.u32 %s0, 4
      %s17 = int_to_ptr.vmem [resolvable:$true] %s16
      %19 = dma.vmem_to_smem %s17, 16, [#allocation2], [#allocation4]
    $region5: #{siamese_forward.1} parent=1 // pred_fallthru
      _
    // Predicated region
    $region6: #{siamese_forward.1} parent=1 // pred_check
      _
    $region7: #{siamese_forward.1} parent=1 // pred_check_branch
      %21 = sbr.rel (0) target = $region9
    $region8: #{siamese_forward.1} parent=1 // pred_region
      _
    $region9: #{siamese_forward.1} parent=1 // pred_fallthru
      _
    // Predicated region
    $region10: #{siamese_forward.1} parent=1 // pred_check
      _
    $region11: #{siamese_forward.1} parent=1 // pred_check_branch
      %23 = sbr.rel (0) target = $region13
    $region12: #{siamese_forward.1} parent=1 // pred_region
      _
    $region13: #{siamese_forward.1} parent=1 // pred_fallthru
      _
    // Predicated region
    $region14: #{siamese_forward.1} parent=1 // pred_check
      _
    $region15: #{siamese_forward.1} parent=1 // pred_check_branch
      %25 = sbr.rel (0) target = $region17
    $region16: #{siamese_forward.1} parent=1 // pred_region
      %26 = dma.done [#allocation4], 16
    $region17: #{siamese_forward.1} parent=1 // pred_fallthru
      _
    %27 = sfence
    %s28 = sld [smem:[#allocation2]]
    %s29 = scalar_lea.vmem %s1, %s28
    %v30 = vld [vmem:[%s29] sm:$0x1]
    %s31 = sld [smem:[#allocation2 + $0x1]]
    %s32 = scalar_lea.vmem %s1, %s31
    %v33 = vld [vmem:[%s32] sm:$0x1]
    %s34 = sld [smem:[#allocation2 + $0x2]]
    %s35 = scalar_lea.vmem %s1, %s34
    %v36 = vld [vmem:[%s35] sm:$0x1]
    %s37 = sld [smem:[#allocation2 + $0x3]]
    %s38 = scalar_lea.vmem %s1, %s37
    %v39 = vld [vmem:[%s38] sm:$0x1]
    %s40 = sld [smem:[#allocation2 + $0x4]]
    %s41 = scalar_lea.vmem %s1, %s40
    %v42 = vld [vmem:[%s41] sm:$0x1]
    %s43 = sld [smem:[#allocation2 + $0x5]]
    %s44 = scalar_lea.vmem %s1, %s43
    %v45 = vld [vmem:[%s44] sm:$0x1]
    %s46 = sld [smem:[#allocation2 + $0x6]]
    %s47 = scalar_lea.vmem %s1, %s46
    %v48 = vld [vmem:[%s47] sm:$0x1]
    %s49 = sld [smem:[#allocation2 + $0x7]]
    %s50 = scalar_lea.vmem %s1, %s49
    %v51 = vld [vmem:[%s50] sm:$0x1]
    %v52 = vmax.f32 %v30, %v33
    %v53 = vmax.f32 %v36, %v39
    %v54 = vmax.f32 %v42, %v45
    %v55 = vmax.f32 %v48, %v51
    %v56 = vmax.f32 %v52, %v53
    %v57 = vmax.f32 %v54, %v55
    %v58 = vmax.f32 %v56, %v57
    %s59 = sld [smem:[#allocation2 + $0x8]]
    %s60 = scalar_lea.vmem %s1, %s59
    %v61 = vld [vmem:[%s60] sm:$0x1]
    %s62 = sld [smem:[#allocation2 + $0x9]]
    %s63 = scalar_lea.vmem %s1, %s62
    %v64 = vld [vmem:[%s63] sm:$0x1]
    %s65 = sld [smem:[#allocation2 + $0xa]]
    %s66 = scalar_lea.vmem %s1, %s65
    %v67 = vld [vmem:[%s66] sm:$0x1]
    %s68 = sld [smem:[#allocation2 + $0xb]]
    %s69 = scalar_lea.vmem %s1, %s68
    %v70 = vld [vmem:[%s69] sm:$0x1]
    %s71 = sld [smem:[#allocation2 + $0xc]]
    %s72 = scalar_lea.vmem %s1, %s71
    %v73 = vld [vmem:[%s72] sm:$0x1]
    %s74 = sld [smem:[#allocation2 + $0xd]]
    %s75 = scalar_lea.vmem %s1, %s74
    %v76 = vld [vmem:[%s75] sm:$0x1]
    %s77 = sld [smem:[#allocation2 + $0xe]]
    %s78 = scalar_lea.vmem %s1, %s77
    %v79 = vld [vmem:[%s78] sm:$0x1]
    %s80 = sld [smem:[#allocation2 + $0xf]]
    %s81 = scalar_lea.vmem %s1, %s80
    %v82 = vld [vmem:[%s81] sm:$0x1]
    %v83 = vmax.f32 %v61, %v64
    %v84 = vmax.f32 %v67, %v70
    %v85 = vmax.f32 %v73, %v76
    %v86 = vmax.f32 %v79, %v82
    %v87 = vmax.f32 %v83, %v84
    %v88 = vmax.f32 %v85, %v86
    %v89 = vmax.f32 %v87, %v88
    %s90 = sld [smem:[#allocation2 + $0x10]]
    %s91 = scalar_lea.vmem %s1, %s90
    %v92 = vld [vmem:[%s91] sm:$0x1]
    %s93 = sld [smem:[#allocation2 + $0x11]]
    %s94 = scalar_lea.vmem %s1, %s93
    %v95 = vld [vmem:[%s94] sm:$0x1]
    %s96 = sld [smem:[#allocation2 + $0x12]]
    %s97 = scalar_lea.vmem %s1, %s96
    %v98 = vld [vmem:[%s97] sm:$0x1]
    %s99 = sld [smem:[#allocation2 + $0x13]]
    %s100 = scalar_lea.vmem %s1, %s99
    %v101 = vld [vmem:[%s100] sm:$0x1]
    %s102 = sld [smem:[#allocation2 + $0x14]]
    %s103 = scalar_lea.vmem %s1, %s102
    %v104 = vld [vmem:[%s103] sm:$0x1]
    %s105 = sld [smem:[#allocation2 + $0x15]]
    %s106 = scalar_lea.vmem %s1, %s105
    %v107 = vld [vmem:[%s106] sm:$0x1]
    %s108 = sld [smem:[#allocation2 + $0x16]]
    %s109 = scalar_lea.vmem %s1, %s108
    %v110 = vld [vmem:[%s109] sm:$0x1]
    %s111 = sld [smem:[#allocation2 + $0x17]]
    %s112 = scalar_lea.vmem %s1, %s111
    %v113 = vld [vmem:[%s112] sm:$0x1]
    %v114 = vmax.f32 %v92, %v95
    %v115 = vmax.f32 %v98, %v101
    %v116 = vmax.f32 %v104, %v107
    %v117 = vmax.f32 %v110, %v113
    %v118 = vmax.f32 %v114, %v115
    %v119 = vmax.f32 %v116, %v117
    %v120 = vmax.f32 %v118, %v119
    %s121 = sld [smem:[#allocation2 + $0x18]]
    %s122 = scalar_lea.vmem %s1, %s121
    %v123 = vld [vmem:[%s122] sm:$0x1]
    %s124 = sld [smem:[#allocation2 + $0x19]]
    %s125 = scalar_lea.vmem %s1, %s124
    %v126 = vld [vmem:[%s125] sm:$0x1]
    %s127 = sld [smem:[#allocation2 + $0x1a]]
    %s128 = scalar_lea.vmem %s1, %s127
    %v129 = vld [vmem:[%s128] sm:$0x1]
    %s130 = sld [smem:[#allocation2 + $0x1b]]
    %s131 = scalar_lea.vmem %s1, %s130
    %v132 = vld [vmem:[%s131] sm:$0x1]
    %s133 = sld [smem:[#allocation2 + $0x1c]]
    %s134 = scalar_lea.vmem %s1, %s133
    %v135 = vld [vmem:[%s134] sm:$0x1]
    %s136 = sld [smem:[#allocation2 + $0x1d]]
    %s137 = scalar_lea.vmem %s1, %s136
    %v138 = vld [vmem:[%s137] sm:$0x1]
    %s139 = sld [smem:[#allocation2 + $0x1e]]
    %s140 = scalar_lea.vmem %s1, %s139
    %v141 = vld [vmem:[%s140] sm:$0x1]
    %s142 = sld [smem:[#allocation2 + $0x1f]]
    %s143 = scalar_lea.vmem %s1, %s142
    %v144 = vld [vmem:[%s143] sm:$0x1]
    %v145 = vmax.f32 %v123, %v126
    %v146 = vmax.f32 %v129, %v132
    %v147 = vmax.f32 %v135, %v138
    %v148 = vmax.f32 %v141, %v144
    %v149 = vmax.f32 %v145, %v146
    %v150 = vmax.f32 %v147, %v148
    %v151 = vmax.f32 %v149, %v150
    %v153 = vrot.slane %v89, 7
    %v156 = vrot.slane %v120, 6
    %v159 = vrot.slane %v151, 5
    %vm161 = vcmask 1040384
    %v162 = vsel %vm161, %v58, %v153
    %vm163 = vcmask 1041408
    %v164 = vsel %vm163, %v162, %v156
    %vm165 = vcmask 1042432
    %v166 = vsel %vm165, %v164, %v159
    %v167 = vld [vmem:[%s2] sm:$0x1]
    %v169 = vlaneseq
    %v170 = vshrl.u32 %v169, 7
    %v171 = vsub.s32 0, %v170
    %v172 = vrot.slane %v167, %v171
    %v174 = vadd.f32 %v166, %v172
    %v176 = vrot.slane %v174, 2
    %v178 = vmul.f32 %v174, %v176
    %vm179 = vcmask 254976
    %v180 = vsel %vm179, %v178, 0.0
    %181 = vadd.xlane.f32.xlu0 %v180
    %v182 = vpop.xlane.xlu0 %181
    %v183 = vmul.f32 %v174, %v174
    %v184 = vsel %vm179, %v183, 0.0
    %185 = vadd.xlane.f32.xlu0 %v184
    %v186 = vpop.xlane.xlu0 %185
    %vm187 = vcmask 257026
    %v188 = vsel %vm187, %v183, 0.0
    %189 = vadd.xlane.f32.xlu0 %v188
    %v190 = vpop.xlane.xlu0 %189
    %v191 = vmax.f32 %v186, 1e-24
    %v192 = vrsqrt.pop %v191
    %v193 = vmax.f32 %v190, 1e-24
    %v194 = vrsqrt.pop %v193
    %v196 = vrot.slane %v194, 2
    %v198 = vmul.f32 %v192, %v196
    %v199 = vmul.f32 %v182, %v198
    %v200 = vadd.f32 %v199, 1.0
    %v201 = vmul.f32 %v200, 0.5
    %202 = vxpose.xlu0.b32.start [1/16] %v201, 128
    %203 = vxpose.xlu0.b32.cont [2/16] 0.0, 128
    %204 = vxpose.xlu0.b32.cont [3/16] 0.0, 128
    %205 = vxpose.xlu0.b32.cont [4/16] 0.0, 128
    %206 = vxpose.xlu0.b32.cont [5/16] 0.0, 128
    %207 = vxpose.xlu0.b32.cont [6/16] 0.0, 128
    %208 = vxpose.xlu0.b32.cont [7/16] 0.0, 128
    %209 = vxpose.xlu0.b32.cont [8/16] 0.0, 128
    %210 = vxpose.xlu0.b32.cont [9/16] 0.0, 128
    %211 = vxpose.xlu0.b32.cont [10/16] 0.0, 128
    %212 = vxpose.xlu0.b32.cont [11/16] 0.0, 128
    %213 = vxpose.xlu0.b32.cont [12/16] 0.0, 128
    %214 = vxpose.xlu0.b32.cont [13/16] 0.0, 128
    %215 = vxpose.xlu0.b32.cont [14/16] 0.0, 128
    %216 = vxpose.xlu0.b32.cont [15/16] 0.0, 128
    %217 = vxpose.xlu0.b32.end [16/16] 0.0, 128
    %v218 = vpop.trf.xlu0
    %v219 = vpop.trf.xlu0
    %v220 = vpop.trf.xlu0
    %v221 = vpop.trf.xlu0
    %v222 = vpop.trf.xlu0
    %v223 = vpop.trf.xlu0
    %v224 = vpop.trf.xlu0
    %v225 = vpop.trf.xlu0
    %v226 = vpop.trf.xlu0
    %v227 = vpop.trf.xlu0
    %v228 = vpop.trf.xlu0
    %v229 = vpop.trf.xlu0
    %v230 = vpop.trf.xlu0
    %v231 = vpop.trf.xlu0
    %v232 = vpop.trf.xlu0
    %v233 = vpop.trf.xlu0
    %vm234 = vcmask 8192
    %235 = vst.msk [vmem:[#allocation5] sm:$0x1] %vm234, %v218
    // Predicated region
    $region18: #{siamese_forward.1} parent=1 // pred_check
      _
    $region19: #{siamese_forward.1} parent=1 // pred_check_branch
      %237 = sbr.rel (0) target = $region21
    $region20: #{siamese_forward.1} parent=1 // pred_region
      %s239 = ssub.s32 16, 16
      %240 = vsyncadd [#allocation3], %s239
      %s242 = sshll.u32 [#allocation5], 4
      %s243 = int_to_ptr.vmem [resolvable:$true] %s242
      %245 = dma.vmem_to_hbm [thread:$0]  %s243, 16, %s3, [#allocation3]
    $region21: #{siamese_forward.1} parent=1 // pred_fallthru
      _
    // Predicated region
    $region22: #{siamese_forward.1} parent=1 // pred_check
      _
    $region23: #{siamese_forward.1} parent=1 // pred_check_branch
      %247 = sbr.rel (0) target = $region25
    $region24: #{siamese_forward.1} parent=1 // pred_region
      %248 = dma.done [#allocation3], 16
    $region25: #{siamese_forward.1} parent=1 // pred_fallthru
      _
    %249 = vsyncpa [#allocation3], 1
    %250 = vsyncpa [#allocation4], 1

</llo_original>
